<compile_context>
chip_gen: v6e
topology: v6e:2x2x1
jax: 0.10.0
libtpu: 0.0.40
codegen_flags: <defaults>
</compile_context>

<pallas_src>
import jax
import jax.numpy as jnp
from jax.experimental import pallas as pl
from jax.experimental.pallas import tpu as pltpu


def _local_cnn_kernel(x_ref, w_ref, b_ref, o_ref):
    # x_ref: (TB, window, n_zone)   native layout block, n_zone on lanes
    # w_ref: (window, n_kernels)    grid-resident
    # b_ref: (1, n_kernels)         grid-resident
    # o_ref: (TB * n_zone, n_kernels)
    tb, window, n_zone = x_ref.shape
    x = x_ref[...]                                   # (TB, window, n_zone)
    # Swap the two minor dims in VMEM (XLU slot, idle here), then collapse the
    # leading dims (layout-friendly when n_zone is sublane-aligned).
    rows = jnp.transpose(x, (0, 2, 1)).reshape(tb * n_zone, window)
    # One MXU matmul for the whole tile, bias + ReLU fused on the VPU.
    acc = jnp.dot(rows, w_ref[...], preferred_element_type=jnp.float32)
    acc = jnp.maximum(acc + b_ref[...], 0.0)
    # AdaptiveMaxPool2d((1, n_zone)) is an identity here (pool window = 1).
    o_ref[...] = acc.astype(o_ref.dtype)
    # TODO(synk): nn.Dropout is constructed inside forward (training mode); we
    # implement inference semantics (identity), matching eval-time behavior.


def _choose_batch_tile(B, window, n_zone, n_kernels, *, target_rows=2048,
                       vmem_block_budget=8 << 20):
    """How many batch elements each grid step processes.

    Targets ~512-2048 output rows per step (amortizes per-step pipeline
    overhead; large tiles reach ~85% of HBM roofline vs ~29% for tiny tiles)
    while keeping double-buffered input+output blocks well under the scoped
    VMEM default of every TPU generation.
    """
    if B <= 1:
        return max(B, 1)
    bytes_per_batch = 4 * n_zone * (window + n_kernels) * 2  # in+out, 2x buffered
    tb = min(B, max(1, target_rows // max(1, n_zone)))
    tb = min(tb, max(1, vmem_block_budget // max(1, bytes_per_batch)))
    if n_zone % 8 != 0:
        # Output blocks of (tb * n_zone) rows must be sublane-aligned unless the
        # block spans the whole array; simplest safe choice is a single step.
        return B
    while tb > 1 and B % tb != 0:   # exact grid, no ragged edge handling needed
        tb -= 1
    return tb


def local_cnn_forward(x, conv_w, conv_b, *, window, n_zone, n_kernels,
                      batch_tile=None):
    """x: (B, window, n_zone) float32.  Returns tuple with (B, n_zone, n_kernels)."""
    B = x.shape[0]
    assert x.shape == (B, window, n_zone)

    # PyTorch Conv2d weight layout (n_kernels, 1, window, 1) -> (window, n_kernels).
    # Tiny tensors; this wrapper prep is negligible.
    w = jnp.transpose(conv_w[:, 0, :, 0], (1, 0))    # (window, n_kernels)
    b = conv_b.reshape(1, n_kernels)                 # (1, n_kernels)

    tb = batch_tile if batch_tile is not None else _choose_batch_tile(
        B, window, n_zone, n_kernels)
    assert B % tb == 0, "batch_tile must divide the batch size"
    grid = (B // tb,)

    out_flat = pl.pallas_call(
        _local_cnn_kernel,
        out_shape=jax.ShapeDtypeStruct((B * n_zone, n_kernels), x.dtype),
        grid_spec=pltpu.PrefetchScalarGridSpec(
            num_scalar_prefetch=0,
            grid=grid,
            in_specs=[
                # Native layout block: no HBM transpose of x before the kernel.
                pl.BlockSpec((tb, window, n_zone), lambda bi: (bi, 0, 0)),
                # Constant index maps -> blocks stay VMEM resident across steps.
                pl.BlockSpec((window, n_kernels), lambda bi: (0, 0)),
                pl.BlockSpec((1, n_kernels), lambda bi: (0, 0)),
            ],
            out_specs=pl.BlockSpec((tb * n_zone, n_kernels), lambda bi: (bi, 0)),
        ),
        compiler_params=pltpu.CompilerParams(
            dimension_semantics=("parallel",)),   # megacore sharding on v7x
    )(x, w, b)

    # Metadata-only reshape back to the PyTorch output layout; no HBM pass.
    return (out_flat.reshape(B, n_zone, n_kernels),)


def _reference_forward(x, conv_w, conv_b):
    # Pure-JAX reference mirroring the PyTorch forward (eval-time).
    w = conv_w[:, 0, :, 0]                            # (n_kernels, window)
    conv = jnp.einsum("bwz,kw->bkz", x, w) + conv_b[None, :, None]
    act = jnp.maximum(conv, 0.0)                      # relu; pool & dropout = identity
    return jnp.transpose(act, (0, 2, 1))              # (B, n_zone, n_kernels)


if __name__ == "__main__":
    # Small, module-consistent shapes.
    B, window, n_zone, n_kernels = 8, 8, 16, 32

    key = jax.random.PRNGKey(0)
    kx, kw, kb = jax.random.split(key, 3)

    x = jax.random.normal(kx, (B, window, n_zone), dtype=jnp.float32)
    # Deterministic parameter init (shapes follow nn.Conv2d(1, n_kernels, (window, 1))).
    conv_w = jax.random.normal(kw, (n_kernels, 1, window, 1), dtype=jnp.float32) * 0.1
    conv_b = jax.random.normal(kb, (n_kernels,), dtype=jnp.float32) * 0.1

    # batch_tile=4 -> grid=(2,): exercises multi-step pipelining + resident weights.
    (out,) = local_cnn_forward(
        x, conv_w, conv_b, window=window, n_zone=n_zone, n_kernels=n_kernels,
        batch_tile=4)
    out = jax.block_until_ready(out)

    ref = _reference_forward(x, conv_w, conv_b)
    assert out.shape == (B, n_zone, n_kernels)
    assert jnp.allclose(out, ref, atol=1e-5, rtol=1e-5)

    print("KERNEL_OK")
</pallas_src>

<mosaic_0001>
module attributes {stable_mosaic.version = 11 : i64} {
  func.func @_local_cnn_kernel(%arg0: i32, %arg1: memref<4x8x16xf32, #tpu.memory_space<vmem>>, %arg2: memref<8x32xf32, #tpu.memory_space<vmem>>, %arg3: memref<1x32xf32, #tpu.memory_space<vmem>>, %arg4: memref<64x32xf32, #tpu.memory_space<vmem>>) attributes {dimension_semantics = [#tpu.dimension_semantics<parallel>], iteration_bounds = array<i64: 2>, scalar_prefetch = 0 : i64, scratch_operands = 0 : i64, tpu.core_type = #tpu.core_type<tc>, window_params = [{transform_indices = @transform_0, window_bounds = array<i64: 4, 8, 16>}, {pipeline_mode = #tpu.pipeline_mode<synchronous>, transform_indices = @transform_1, window_bounds = array<i64: 8, 32>}, {pipeline_mode = #tpu.pipeline_mode<synchronous>, transform_indices = @transform_2, window_bounds = array<i64: 1, 32>}, {transform_indices = @transform_3, window_bounds = array<i64: 64, 32>}]} {
    %c0 = arith.constant 0 : index
    %c0_0 = arith.constant 0 : index
    %c0_1 = arith.constant 0 : index
    %0 = vector.load %arg1[%c0, %c0_0, %c0_1] : memref<4x8x16xf32, #tpu.memory_space<vmem>>, vector<4x8x16xf32>
    %1 = tpu.transpose %0, [0, 2, 1] : vector<4x8x16xf32> -> vector<4x16x8xf32>
    %2 = vector.shape_cast %1 : vector<4x16x8xf32> to vector<64x8xf32>
    %c0_2 = arith.constant 0 : index
    %c0_3 = arith.constant 0 : index
    %3 = vector.load %arg2[%c0_2, %c0_3] : memref<8x32xf32, #tpu.memory_space<vmem>>, vector<8x32xf32>
    %cst = arith.constant dense<0.000000e+00> : vector<64x32xf32>
    %4 = tpu.matmul %2, %3, %cst {dimension_numbers = #tpu.dot_dimension_numbers<[1], [0], [0], [1], [0, 0, 1, 1], [], []>} : vector<64x8xf32>, vector<8x32xf32>, vector<64x32xf32> -> vector<64x32xf32>
    %c0_4 = arith.constant 0 : index
    %c0_5 = arith.constant 0 : index
    %5 = vector.load %arg3[%c0_4, %c0_5] : memref<1x32xf32, #tpu.memory_space<vmem>>, vector<1x32xf32>
    %6 = vector.broadcast %5 : vector<1x32xf32> to vector<64x32xf32>
    %7 = arith.addf %4, %6 : vector<64x32xf32>
    %cst_6 = arith.constant 0.000000e+00 : f32
    %8 = vector.broadcast %cst_6 : f32 to vector<64x32xf32>
    %9 = arith.maximumf %7, %8 : vector<64x32xf32>
    %c0_7 = arith.constant 0 : index
    %c0_8 = arith.constant 0 : index
    %10 = vector.load %arg4[%c0_7, %c0_8] : memref<64x32xf32, #tpu.memory_space<vmem>>, vector<64x32xf32>
    tpu.vector_store %arg4[%c0_7, %c0_8], %9 {strides = array<i32>} : memref<64x32xf32, #tpu.memory_space<vmem>>, vector<64x32xf32>,
    return
  }
  func.func @transform_0(%arg0: i32) -> (i32, i32, i32) {
    %c0_i32 = arith.constant 0 : i32
    %c0_i32_0 = arith.constant 0 : i32
    %c0_i32_1 = arith.constant 0 : i32
    return %arg0, %c0_i32, %c0_i32_0 : i32, i32, i32
  }
  func.func @transform_1(%arg0: i32) -> (i32, i32) {
    %c0_i32 = arith.constant 0 : i32
    %c0_i32_0 = arith.constant 0 : i32
    %c0_i32_1 = arith.constant 0 : i32
    return %c0_i32, %c0_i32_0 : i32, i32
  }
  func.func @transform_2(%arg0: i32) -> (i32, i32) {
    %c0_i32 = arith.constant 0 : i32
    %c0_i32_0 = arith.constant 0 : i32
    %c0_i32_1 = arith.constant 0 : i32
    return %c0_i32, %c0_i32_0 : i32, i32
  }
  func.func @transform_3(%arg0: i32) -> (i32, i32) {
    %c0_i32 = arith.constant 0 : i32
    %c0_i32_0 = arith.constant 0 : i32
    return %arg0, %c0_i32 : i32, i32
  }
}

</mosaic_0001>

<llo_original>
// kernel: tpu_custom_call.1
$region0: #{tpu_custom_call.1}
  #allocation0 [shape = 'u32[]', space=smem, size = 0x4, offset = 0x4, fixed_abs, tag = 'smem constant byte address 0x4 - core index']
  #allocation1 [shape = 'u32[144,128]{1,0:T(1,128)}', space=vmem, size = 0x12000, scoped, tag = 'internal scratch']
  %s0 = inlined_call_operand.hbm [shape: f32[8,8,16], index: 0, kind: input, shape index: {}]
  %s1 = inlined_call_operand.hbm [shape: f32[8,32], index: 1, kind: input, shape index: {}]
  %s2 = inlined_call_operand.vmem [shape: f32[1,32], index: 2, kind: input, shape index: {}]
  %s3 = inlined_call_operand.vmem [shape: f32[128,32], index: 3, kind: output, shape index: {}]
  %s4 = sld [smem:[#allocation0]]
  $region53: #{tpu_custom_call.1} parent=0
    _
  %s6 = ssub.s32 1, %s4
  %s7 = scalar_select 0, %s6, %s4
  $region1: #{tpu_custom_call.1} parent=0
    #allocation2 [shape = 'u8[32768]{0}', space=vmem, size = 0x8000, scoped, tag = 'input window, operand 0']
    #allocation3 [shape = 's32[2]{0}', space=sflag, size = 0x8, scoped, tag = 'scoped memory for tpu_custom_call.1']
    #allocation4 [shape = 'u8[4096]{0}', space=vmem, size = 0x1000, scoped, tag = 'input window, operand 1, single buffered']
    #allocation5 [shape = 's32[1]{0}', space=sflag, size = 0x4, scoped, tag = 'scoped memory for tpu_custom_call.1']
    %8 = vsyncpa [#allocation3], 0
    %s9 = scalar_lea.sflag [#allocation3], 1
    %10 = vsyncpa %s9, 0
    %11 = vsyncpa [#allocation5], 0
    loop: start=0, step=1, limit=4
    $region2: #{tpu_custom_call.1} parent=1 // loop_pre_header
      _
    $region3: #{tpu_custom_call.1} parent=1 // loop_header
      %s13 = sphi 0, %s17
      %p14 = scmp.ge.s32.totalorder %s13, 4
      %s23 = sphi 0, %s25
      %s26 = sphi 0, %s23
      %s27 = sphi 0, %s26
      %s43 = sphi 0, %s27
      %s47 = sphi 0, %s47
      %s49 = sphi 0, %s47
      %s50 = sphi 0, %s49
      %s64 = sphi 0, %s50
      %s68 = sphi 0, %s68
      %s70 = sphi 0, %s68
      %s71 = sphi 0, %s70
      %s85 = sphi 0, %s71
      %s91 = sphi 0, %s93
      %s94 = sphi 0, %s91
      %s95 = sphi 0, %s94
      %s111 = sphi 0, %s95
    $region4: #{tpu_custom_call.1} parent=1 // loop_header_branch
      %16 = sbr.rel (%p14) target = $region8
    $region5: #{tpu_custom_call.1} parent=1 // loop_body
      %s18 = ssub.s32 %s13, 1
      %s19 = ssub.s32 %s13, 2
      %s20 = sadd.s32 %s13, 1
      %s21 = ssub.s32 %s13, %s20
      %p22 = scmp.eq.s32.totalorder %s21, 0
      %s24 = sadd.s32 %s23, 1
      %s25 = scalar_select %p22, %s23, %s24
      %p28 = pneg %p22
      %p29 = scmp.eq.s32.totalorder %s13, 1
      %p30 = por %p28, %p29
      %p31 = scmp.ne.s32.totalorder %s23, %s26
      %p32 = scmp.eq.s32.totalorder %s13, 0
      %p33 = por %p31, %p32
      %p34 = scmp.ne.s32.totalorder %s23, %s26
      %p35 = scmp.eq.s32.totalorder %s18, 1
      %p36 = por %p34, %p35
      %p37 = scmp.ne.s32.totalorder %s26, %s27
      %p38 = scmp.eq.s32.totalorder %s18, 0
      %p39 = por %p37, %p38
      %p40 = scmp.ne.s32.totalorder %s26, %s27
      %p41 = scmp.eq.s32.totalorder %s19, 1
      %p42 = por %p40, %p41
      %p44 = scmp.ne.s32.totalorder %s27, %s43
      %p45 = scmp.eq.s32.totalorder %s19, 0
      %p46 = por %p44, %p45
      %s48 = sadd.s32 %s47, 1
      %p51 = scmp.eq.s32.totalorder %s13, 1
      %p52 = scmp.ne.s32.totalorder %s47, %s49
      %p53 = scmp.eq.s32.totalorder %s13, 0
      %p54 = por %p52, %p53
      %p55 = scmp.ne.s32.totalorder %s47, %s49
      %p56 = scmp.eq.s32.totalorder %s18, 1
      %p57 = por %p55, %p56
      %p58 = scmp.ne.s32.totalorder %s49, %s50
      %p59 = scmp.eq.s32.totalorder %s18, 0
      %p60 = por %p58, %p59
      %p61 = scmp.ne.s32.totalorder %s49, %s50
      %p62 = scmp.eq.s32.totalorder %s19, 1
      %p63 = por %p61, %p62
      %p65 = scmp.ne.s32.totalorder %s50, %s64
      %p66 = scmp.eq.s32.totalorder %s19, 0
      %p67 = por %p65, %p66
      %s69 = sadd.s32 %s68, 1
      %p72 = scmp.eq.s32.totalorder %s13, 1
      %p73 = scmp.ne.s32.totalorder %s68, %s70
      %p74 = scmp.eq.s32.totalorder %s13, 0
      %p75 = por %p73, %p74
      %p76 = scmp.ne.s32.totalorder %s68, %s70
      %p77 = scmp.eq.s32.totalorder %s18, 1
      %p78 = por %p76, %p77
      %p79 = scmp.ne.s32.totalorder %s70, %s71
      %p80 = scmp.eq.s32.totalorder %s18, 0
      %p81 = por %p79, %p80
      %p82 = scmp.ne.s32.totalorder %s70, %s71
      %p83 = scmp.eq.s32.totalorder %s19, 1
      %p84 = por %p82, %p83
      %p86 = scmp.ne.s32.totalorder %s71, %s85
      %p87 = scmp.eq.s32.totalorder %s19, 0
      %p88 = por %p86, %p87
      %s89 = ssub.s32 %s13, %s20
      %p90 = scmp.eq.s32.totalorder %s89, 0
      %s92 = sadd.s32 %s91, 1
      %s93 = scalar_select %p90, %s91, %s92
      %p96 = pneg %p90
      %p97 = scmp.eq.s32.totalorder %s13, 1
      %p98 = por %p96, %p97
      %p99 = scmp.ne.s32.totalorder %s91, %s94
      %p100 = scmp.eq.s32.totalorder %s13, 0
      %p101 = por %p99, %p100
      %p102 = scmp.ne.s32.totalorder %s91, %s94
      %p103 = scmp.eq.s32.totalorder %s18, 1
      %p104 = por %p102, %p103
      %p105 = scmp.ne.s32.totalorder %s94, %s95
      %p106 = scmp.eq.s32.totalorder %s18, 0
      %p107 = por %p105, %p106
      %p108 = scmp.ne.s32.totalorder %s94, %s95
      %p109 = scmp.eq.s32.totalorder %s19, 1
      %p110 = por %p108, %p109
      %p112 = scmp.ne.s32.totalorder %s95, %s111
      %p113 = scmp.eq.s32.totalorder %s19, 0
      %p114 = por %p112, %p113
      %p115 = scmp.le.s32.totalorder 1, %s13
      %p116 = scmp.lt.s32.totalorder %s13, 3
      %p117 = pnand %p115, %p116
      %p118 = pneg %p117
      // Predicated region
      $region9: #{tpu_custom_call.1} parent=5 // pred_check
        _
      $region10: #{tpu_custom_call.1} parent=5 // pred_check_branch
        %120 = sbr.rel (%p117) target = $region12
      $region11: #{tpu_custom_call.1} parent=5 // pred_region
        %s121 = ssub.s32 %s13, 1
        // Predicated region
        $region13: #{tpu_custom_call.1} parent=11 // pred_check
          %p122 = pneg %p60
        $region14: #{tpu_custom_call.1} parent=11 // pred_check_branch
          %124 = sbr.rel (%p122) target = $region16
        $region15: #{tpu_custom_call.1} parent=11 // pred_region
          %s126 = ssub.s32 128, 128
          %127 = vsyncadd [#allocation5], %s126
          %s129 = sshll.u32 [#allocation4], 4
          %s130 = int_to_ptr.vmem [resolvable:$true] %s129
          %132 = dma.hbm_to_vmem [thread:$0]  %s1, 128, %s130, [#allocation5]
        $region16: #{tpu_custom_call.1} parent=11 // pred_fallthru
          _
        // Predicated region
        $region17: #{tpu_custom_call.1} parent=11 // pred_check
          %p133 = pneg %p81
        $region18: #{tpu_custom_call.1} parent=11 // pred_check_branch
          %135 = sbr.rel (%p133) target = $region20
        $region19: #{tpu_custom_call.1} parent=11 // pred_region
          _
        $region20: #{tpu_custom_call.1} parent=11 // pred_fallthru
          _
      $region12: #{tpu_custom_call.1} parent=5 // pred_fallthru
        _
      %p136 = scmp.lt.s32.totalorder %s13, 2
      // Predicated region
      $region21: #{tpu_custom_call.1} parent=5 // pred_check
        %p137 = pneg %p136
      $region22: #{tpu_custom_call.1} parent=5 // pred_check_branch
        %139 = sbr.rel (%p137) target = $region24
      $region23: #{tpu_custom_call.1} parent=5 // pred_region
        // Predicated region
        $region25: #{tpu_custom_call.1} parent=23 // pred_check
          %p140 = pneg %p33
        $region26: #{tpu_custom_call.1} parent=23 // pred_check_branch
          %142 = sbr.rel (%p140) target = $region28
        $region27: #{tpu_custom_call.1} parent=23 // pred_region
          %s143 = sand.u32 %s23, 1
          %s144 = scalar_lea.sflag [#allocation3], %s143
          %s145 = sand.u32 %s23, 1
          %s146 = smul.addr %s145, 32
          %s147 = scalar_lea.vmem [#allocation2], %s146
          %s148 = smul.u32 4, %s13
          %s150 = ssub.s32 512, 512
          %151 = vsyncadd %s144, %s150
          %s152 = smul.addr %s148, 128
          %s153 = scalar_lea.hbm %s0, %s152
          %s154 = sshll.u32 %s147, 4
          %s155 = int_to_ptr.vmem [resolvable:$true] %s154
          %160 = dma.hbm_to_vmem [thread:$0]  %s153, 512, %s155, %s144, 128, 128, 8
        $region28: #{tpu_custom_call.1} parent=23 // pred_fallthru
          _
      $region24: #{tpu_custom_call.1} parent=5 // pred_fallthru
        _
      %p161 = scmp.le.s32.totalorder 1, %s13
      %p162 = scmp.lt.s32.totalorder %s13, 3
      %p163 = pnand %p161, %p162
      %p164 = pneg %p163
      // Predicated region
      $region29: #{tpu_custom_call.1} parent=5 // pred_check
        _
      $region30: #{tpu_custom_call.1} parent=5 // pred_check_branch
        %166 = sbr.rel (%p163) target = $region32
      $region31: #{tpu_custom_call.1} parent=5 // pred_region
        %s167 = ssub.s32 %s13, 1
        %s168 = sand.u32 %s26, 1
        %s169 = scalar_lea.sflag [#allocation3], %s168
        %s170 = sand.u32 %s26, 1
        %s171 = smul.addr %s170, 32
        %s172 = scalar_lea.vmem [#allocation2], %s171
        // Predicated region
        $region33: #{tpu_custom_call.1} parent=31 // pred_check
          %p173 = pneg %p39
        $region34: #{tpu_custom_call.1} parent=31 // pred_check_branch
          %175 = sbr.rel (%p173) target = $region36
        $region35: #{tpu_custom_call.1} parent=31 // pred_region
          %176 = dma.done %s169, 512
        $region36: #{tpu_custom_call.1} parent=31 // pred_fallthru
          _
        // Predicated region
        $region37: #{tpu_custom_call.1} parent=31 // pred_check
          %p177 = pneg %p60
        $region38: #{tpu_custom_call.1} parent=31 // pred_check_branch
          %179 = sbr.rel (%p177) target = $region40
        $region39: #{tpu_custom_call.1} parent=31 // pred_region
          %180 = dma.done [#allocation5], 128
        $region40: #{tpu_custom_call.1} parent=31 // pred_fallthru
          _
        %s181 = sand.u32 %s26, 1
        %s182 = scalar_lea.sflag [#allocation3], %s181
        %s183 = sand.u32 %s26, 1
        %s184 = smul.addr %s183, 32
        %s185 = scalar_lea.vmem [#allocation2], %s184
        %p186 = pneg %p39
        %p187 = pneg %p36
        %p188 = pneg %p60
        %p189 = pneg %p57
        %p190 = pneg %p81
        %p191 = pneg %p78
        %p192 = pneg %p107
        %p193 = pneg %p104
        %s194 = smul.u32 8, %s18
        %p195 = scmp.lt.s32.totalorder %s194, 15
        %s196 = scalar_select %p195, %s194, 15
        %s197 = smul.addr %s196, 8
        %s198 = scalar_lea.vmem %s3, %s197
        %s199 = smul.u32 4, %s18
        %s200 = smul.u32 8, %s18
        %p201 = scmp.lt.s32.totalorder %s200, 15
        %s202 = scalar_select %p201, %s200, 15
        %s203 = smul.addr %s202, 8
        %s204 = scalar_lea.vmem %s3, %s203
        %s205 = smul.u32 8, %s18
        %v206 = vld [vmem:[%s172] sm:$0xff]
        %v207 = vld [vmem:[%s172 + $0x8] sm:$0xff]
        %v208 = vld [vmem:[%s172 + $0x10] sm:$0xff]
        %v209 = vld [vmem:[%s172 + $0x18] sm:$0xff]
        %210 = vxpose.xlu0.b32.start [1/16] %v206, 128
        %211 = vxpose.xlu0.b32.cont [2/16] 0.0, 128
        %212 = vxpose.xlu0.b32.cont [3/16] 0.0, 128
        %213 = vxpose.xlu0.b32.cont [4/16] 0.0, 128
        %214 = vxpose.xlu0.b32.cont [5/16] 0.0, 128
        %215 = vxpose.xlu0.b32.cont [6/16] 0.0, 128
        %216 = vxpose.xlu0.b32.cont [7/16] 0.0, 128
        %217 = vxpose.xlu0.b32.cont [8/16] 0.0, 128
        %218 = vxpose.xlu0.b32.cont [9/16] 0.0, 128
        %219 = vxpose.xlu0.b32.cont [10/16] 0.0, 128
        %220 = vxpose.xlu0.b32.cont [11/16] 0.0, 128
        %221 = vxpose.xlu0.b32.cont [12/16] 0.0, 128
        %222 = vxpose.xlu0.b32.cont [13/16] 0.0, 128
        %223 = vxpose.xlu0.b32.cont [14/16] 0.0, 128
        %224 = vxpose.xlu0.b32.cont [15/16] 0.0, 128
        %225 = vxpose.xlu0.b32.end [16/16] 0.0, 128
        %v226 = vpop.trf.xlu0
        %v227 = vpop.trf.xlu0
        %v228 = vpop.trf.xlu0
        %v229 = vpop.trf.xlu0
        %v230 = vpop.trf.xlu0
        %v231 = vpop.trf.xlu0
        %v232 = vpop.trf.xlu0
        %v233 = vpop.trf.xlu0
        %v234 = vpop.trf.xlu0
        %v235 = vpop.trf.xlu0
        %v236 = vpop.trf.xlu0
        %v237 = vpop.trf.xlu0
        %v238 = vpop.trf.xlu0
        %v239 = vpop.trf.xlu0
        %v240 = vpop.trf.xlu0
        %v241 = vpop.trf.xlu0
        %242 = vxpose.xlu0.b32.start [1/16] %v207, 128
        %243 = vxpose.xlu0.b32.cont [2/16] 0.0, 128
        %244 = vxpose.xlu0.b32.cont [3/16] 0.0, 128
        %245 = vxpose.xlu0.b32.cont [4/16] 0.0, 128
        %246 = vxpose.xlu0.b32.cont [5/16] 0.0, 128
        %247 = vxpose.xlu0.b32.cont [6/16] 0.0, 128
        %248 = vxpose.xlu0.b32.cont [7/16] 0.0, 128
        %249 = vxpose.xlu0.b32.cont [8/16] 0.0, 128
        %250 = vxpose.xlu0.b32.cont [9/16] 0.0, 128
        %251 = vxpose.xlu0.b32.cont [10/16] 0.0, 128
        %252 = vxpose.xlu0.b32.cont [11/16] 0.0, 128
        %253 = vxpose.xlu0.b32.cont [12/16] 0.0, 128
        %254 = vxpose.xlu0.b32.cont [13/16] 0.0, 128
        %255 = vxpose.xlu0.b32.cont [14/16] 0.0, 128
        %256 = vxpose.xlu0.b32.cont [15/16] 0.0, 128
        %257 = vxpose.xlu0.b32.end [16/16] 0.0, 128
        %v258 = vpop.trf.xlu0
        %v259 = vpop.trf.xlu0
        %v260 = vpop.trf.xlu0
        %v261 = vpop.trf.xlu0
        %v262 = vpop.trf.xlu0
        %v263 = vpop.trf.xlu0
        %v264 = vpop.trf.xlu0
        %v265 = vpop.trf.xlu0
        %v266 = vpop.trf.xlu0
        %v267 = vpop.trf.xlu0
        %v268 = vpop.trf.xlu0
        %v269 = vpop.trf.xlu0
        %v270 = vpop.trf.xlu0
        %v271 = vpop.trf.xlu0
        %v272 = vpop.trf.xlu0
        %v273 = vpop.trf.xlu0
        %274 = vxpose.xlu0.b32.start [1/16] %v208, 128
        %275 = vxpose.xlu0.b32.cont [2/16] 0.0, 128
        %276 = vxpose.xlu0.b32.cont [3/16] 0.0, 128
        %277 = vxpose.xlu0.b32.cont [4/16] 0.0, 128
        %278 = vxpose.xlu0.b32.cont [5/16] 0.0, 128
        %279 = vxpose.xlu0.b32.cont [6/16] 0.0, 128
        %280 = vxpose.xlu0.b32.cont [7/16] 0.0, 128
        %281 = vxpose.xlu0.b32.cont [8/16] 0.0, 128
        %282 = vxpose.xlu0.b32.cont [9/16] 0.0, 128
        %283 = vxpose.xlu0.b32.cont [10/16] 0.0, 128
        %284 = vxpose.xlu0.b32.cont [11/16] 0.0, 128
        %285 = vxpose.xlu0.b32.cont [12/16] 0.0, 128
        %286 = vxpose.xlu0.b32.cont [13/16] 0.0, 128
        %287 = vxpose.xlu0.b32.cont [14/16] 0.0, 128
        %288 = vxpose.xlu0.b32.cont [15/16] 0.0, 128
        %289 = vxpose.xlu0.b32.end [16/16] 0.0, 128
        %v290 = vpop.trf.xlu0
        %v291 = vpop.trf.xlu0
        %v292 = vpop.trf.xlu0
        %v293 = vpop.trf.xlu0
        %v294 = vpop.trf.xlu0
        %v295 = vpop.trf.xlu0
        %v296 = vpop.trf.xlu0
        %v297 = vpop.trf.xlu0
        %v298 = vpop.trf.xlu0
        %v299 = vpop.trf.xlu0
        %v300 = vpop.trf.xlu0
        %v301 = vpop.trf.xlu0
        %v302 = vpop.trf.xlu0
        %v303 = vpop.trf.xlu0
        %v304 = vpop.trf.xlu0
        %v305 = vpop.trf.xlu0
        %306 = vxpose.xlu0.b32.start [1/16] %v209, 128
        %307 = vxpose.xlu0.b32.cont [2/16] 0.0, 128
        %308 = vxpose.xlu0.b32.cont [3/16] 0.0, 128
        %309 = vxpose.xlu0.b32.cont [4/16] 0.0, 128
        %310 = vxpose.xlu0.b32.cont [5/16] 0.0, 128
        %311 = vxpose.xlu0.b32.cont [6/16] 0.0, 128
        %312 = vxpose.xlu0.b32.cont [7/16] 0.0, 128
        %313 = vxpose.xlu0.b32.cont [8/16] 0.0, 128
        %314 = vxpose.xlu0.b32.cont [9/16] 0.0, 128
        %315 = vxpose.xlu0.b32.cont [10/16] 0.0, 128
        %316 = vxpose.xlu0.b32.cont [11/16] 0.0, 128
        %317 = vxpose.xlu0.b32.cont [12/16] 0.0, 128
        %318 = vxpose.xlu0.b32.cont [13/16] 0.0, 128
        %319 = vxpose.xlu0.b32.cont [14/16] 0.0, 128
        %320 = vxpose.xlu0.b32.cont [15/16] 0.0, 128
        %321 = vxpose.xlu0.b32.end [16/16] 0.0, 128
        %v322 = vpop.trf.xlu0
        %v323 = vpop.trf.xlu0
        %v324 = vpop.trf.xlu0
        %v325 = vpop.trf.xlu0
        %v326 = vpop.trf.xlu0
        %v327 = vpop.trf.xlu0
        %v328 = vpop.trf.xlu0
        %v329 = vpop.trf.xlu0
        %v330 = vpop.trf.xlu0
        %v331 = vpop.trf.xlu0
        %v332 = vpop.trf.xlu0
        %v333 = vpop.trf.xlu0
        %v334 = vpop.trf.xlu0
        %v335 = vpop.trf.xlu0
        %v336 = vpop.trf.xlu0
        %v337 = vpop.trf.xlu0
        %v338 = vld [vmem:[#allocation4] sm:$0xff]
        %v339 = vld [vmem:[%s2] sm:$0x1]
        %v341 = vlaneseq
        %v342 = vshrl.u32 %v341, 7
        %v343 = vsub.s32 0, %v342
        %v344 = vrot.slane %v339, %v343
        %vm346 = vcmask 64512
        %v348 = vsel %vm346, %v226, 0
        %v351 = vsel %vm346, %v227, 0
        %v354 = vsel %vm346, %v258, 0
        %v357 = vsel %vm346, %v259, 0
        %v360 = vsel %vm346, %v290, 0
        %v363 = vsel %vm346, %v291, 0
        %v366 = vsel %vm346, %v322, 0
        %v369 = vsel %vm346, %v323, 0
        %371 = vmatprep.subr.mxu0 0.0
        %372 = vmatpush1.msra.mxu0 0.0
        %373 = vmatprep.subr.mxu0 0.0
        %374 = vmatpush1.msra.mxu0 0.0
        %375 = vmatprep.subr.mxu0 0.0
        %376 = vmatpush1.msra.mxu0 0.0
        %377 = vmatprep.subr.mxu0 0.0
        %378 = vmatpush1.msra.mxu0 0.0
        %379 = vmatprep.subr.mxu0 0.0
        %380 = vmatpush1.msra.mxu0 0.0
        %381 = vmatprep.subr.mxu0 0.0
        %382 = vmatpush1.msra.mxu0 0.0
        %383 = vmatprep.subr.mxu0 0.0
        %384 = vmatpush1.msra.mxu0 0.0
        %385 = vmatprep.subr.mxu0 0.0
        %386 = vmatpush1.msra.mxu0 0.0
        %387 = vmatprep.subr.mxu0 0.0
        %388 = vmatpush1.msra.mxu0 0.0
        %389 = vmatprep.subr.mxu0 0.0
        %390 = vmatpush1.msra.mxu0 0.0
        %391 = vmatprep.subr.mxu0 0.0
        %392 = vmatpush1.msra.mxu0 0.0
        %393 = vmatprep.subr.mxu0 0.0
        %394 = vmatpush1.msra.mxu0 0.0
        %395 = vmatprep.subr.mxu0 0.0
        %396 = vmatpush1.msra.mxu0 0.0
        %397 = vmatprep.subr.mxu0 0.0
        %398 = vmatpush1.msra.mxu0 0.0
        %399 = vmatprep.subr.mxu0 0.0
        %400 = vmatpush1.msra.mxu0 0.0
        %401 = vmatprep.subr.mxu0 0.0
        %402 = vmatpush1.msra.mxu0 %v338
        %403 = vmatprep.subr.mxu0 0.0
        %404 = vmatpush2.msra.mxu0 0.0
        %405 = vmatprep.subr.mxu0 0.0
        %406 = vmatpush2.msra.mxu0 0.0
        %407 = vmatprep.subr.mxu0 0.0
        %408 = vmatpush2.msra.mxu0 0.0
        %409 = vmatprep.subr.mxu0 0.0
        %410 = vmatpush2.msra.mxu0 0.0
        %411 = vmatprep.subr.mxu0 0.0
        %412 = vmatpush2.msra.mxu0 0.0
        %413 = vmatprep.subr.mxu0 0.0
        %414 = vmatpush2.msra.mxu0 0.0
        %415 = vmatprep.subr.mxu0 0.0
        %416 = vmatpush2.msra.mxu0 0.0
        %417 = vmatprep.subr.mxu0 0.0
        %418 = vmatpush2.msra.mxu0 0.0
        %419 = vmatprep.subr.mxu0 0.0
        %420 = vmatpush2.msra.mxu0 0.0
        %421 = vmatprep.subr.mxu0 0.0
        %422 = vmatpush2.msra.mxu0 0.0
        %423 = vmatprep.subr.mxu0 0.0
        %424 = vmatpush2.msra.mxu0 0.0
        %425 = vmatprep.subr.mxu0 0.0
        %426 = vmatpush2.msra.mxu0 0.0
        %427 = vmatprep.subr.mxu0 0.0
        %428 = vmatpush2.msra.mxu0 0.0
        %429 = vmatprep.subr.mxu0 0.0
        %430 = vmatpush2.msra.mxu0 0.0
        %431 = vmatprep.subr.mxu0 0.0
        %432 = vmatpush2.msra.mxu0 0.0
        %433 = vmatprep.subr.mxu0 0.0
        %434 = vmatpush2.msra.mxu0 0.0
        %435 = vmatprep.mubr.f32.mxu0 0.0
        %436 = vmatmul.mubr.f32.gmra.mxu0 %v348
        %v437 = vpop.f32.mrf.mxu0
        %v438 = vadd.f32 %v344, %v437
        %v439 = vpop.f32.mrf.mxu0
        %440 = vmatprep.mubr.f32.mxu0 0.0
        %441 = vmatmul.mubr.f32.gmra.mxu0 %v351
        %v442 = vpop.f32.mrf.mxu0
        %v443 = vadd.f32 %v344, %v442
        %v444 = vpop.f32.mrf.mxu0
        %445 = vmatprep.mubr.f32.mxu0 0.0
        %446 = vmatmul.mubr.f32.gmra.mxu0 %v354
        %v447 = vpop.f32.mrf.mxu0
        %v448 = vadd.f32 %v344, %v447
        %v449 = vpop.f32.mrf.mxu0
        %450 = vmatprep.mubr.f32.mxu0 0.0
        %451 = vmatmul.mubr.f32.gmra.mxu0 %v357
        %v452 = vpop.f32.mrf.mxu0
        %v453 = vadd.f32 %v344, %v452
        %v454 = vpop.f32.mrf.mxu0
        %455 = vmatprep.mubr.f32.mxu0 0.0
        %456 = vmatmul.mubr.f32.gmra.mxu0 %v360
        %v457 = vpop.f32.mrf.mxu0
        %v458 = vadd.f32 %v344, %v457
        %v459 = vpop.f32.mrf.mxu0
        %460 = vmatprep.mubr.f32.mxu0 0.0
        %461 = vmatmul.mubr.f32.gmra.mxu0 %v363
        %v462 = vpop.f32.mrf.mxu0
        %v463 = vadd.f32 %v344, %v462
        %v464 = vpop.f32.mrf.mxu0
        %465 = vmatprep.mubr.f32.mxu0 0.0
        %466 = vmatmul.mubr.f32.gmra.mxu0 %v366
        %v467 = vpop.f32.mrf.mxu0
        %v468 = vadd.f32 %v344, %v467
        %v469 = vpop.f32.mrf.mxu0
        %470 = vmatprep.mubr.f32.mxu0 0.0
        %471 = vmatmul.mubr.f32.gmra.mxu0 %v369
        %v472 = vpop.f32.mrf.mxu0
        %v473 = vadd.f32 %v344, %v472
        %v474 = vpop.f32.mrf.mxu0
        %475 = vdwg.mxu0
        %v476 = vmax.f32 %v438, 0.0
        %v477 = vmax.f32 %v443, 0.0
        %v478 = vmax.f32 %v448, 0.0
        %v479 = vmax.f32 %v453, 0.0
        %v480 = vmax.f32 %v458, 0.0
        %v481 = vmax.f32 %v463, 0.0
        %v482 = vmax.f32 %v468, 0.0
        %v483 = vmax.f32 %v473, 0.0
        %vm484 = vcmask 261120
        %485 = vst.msk [vmem:[%s204] sm:$0xff] %vm484, %v476
        %486 = vst.msk [vmem:[%s204 + $0x8] sm:$0xff] %vm484, %v477
        %487 = vst.msk [vmem:[%s204 + $0x10] sm:$0xff] %vm484, %v478
        %488 = vst.msk [vmem:[%s204 + $0x18] sm:$0xff] %vm484, %v479
        %489 = vst.msk [vmem:[%s204 + $0x20] sm:$0xff] %vm484, %v480
        %490 = vst.msk [vmem:[%s204 + $0x28] sm:$0xff] %vm484, %v481
        %491 = vst.msk [vmem:[%s204 + $0x30] sm:$0xff] %vm484, %v482
        %492 = vst.msk [vmem:[%s204 + $0x38] sm:$0xff] %vm484, %v483
        %s493 = smul.u32 8, %s18
        %p494 = scmp.lt.s32.totalorder %s493, 15
        %s495 = scalar_select %p494, %s493, 15
        %s496 = smul.addr %s495, 8
        %s497 = scalar_lea.vmem %s3, %s496
        // Predicated region
        $region41: #{tpu_custom_call.1} parent=31 // pred_check
          %p498 = pneg %p104
        $region42: #{tpu_custom_call.1} parent=31 // pred_check_branch
          %500 = sbr.rel (%p498) target = $region44
        $region43: #{tpu_custom_call.1} parent=31 // pred_region
          %s501 = smul.u32 8, %s18
        $region44: #{tpu_custom_call.1} parent=31 // pred_fallthru
          _
      $region32: #{tpu_custom_call.1} parent=5 // pred_fallthru
        _
      %p502 = scmp.le.s32.totalorder 2, %s13
      // Predicated region
      $region45: #{tpu_custom_call.1} parent=5 // pred_check
        %p503 = pneg %p502
      $region46: #{tpu_custom_call.1} parent=5 // pred_check_branch
        %505 = sbr.rel (%p503) target = $region48
      $region47: #{tpu_custom_call.1} parent=5 // pred_region
        %s506 = ssub.s32 %s13, 2
        // Predicated region
        $region49: #{tpu_custom_call.1} parent=47 // pred_check
          %p507 = pneg %p110
        $region50: #{tpu_custom_call.1} parent=47 // pred_check_branch
          %509 = sbr.rel (%p507) target = $region52
        $region51: #{tpu_custom_call.1} parent=47 // pred_region
          %s510 = smul.u32 8, %s19
          %p511 = scmp.lt.s32.totalorder %s510, 15
          %s512 = scalar_select %p511, %s510, 15
          %s513 = smul.addr %s512, 8
          %s514 = scalar_lea.vmem %s3, %s513
        $region52: #{tpu_custom_call.1} parent=47 // pred_fallthru
          _
      $region48: #{tpu_custom_call.1} parent=5 // pred_fallthru
        _
    $region6: #{tpu_custom_call.1} parent=1 // loop_footer
      %s17 = sadd.s32 1, %s13
    $region7: #{tpu_custom_call.1} parent=1 // loop_footer_branch
      %12 = sbr.rel target = $region3
    $region8: #{tpu_custom_call.1} parent=1 // loop_exit
      _
    %515 = vsyncpa [#allocation3], 1
    %s516 = scalar_lea.sflag [#allocation3], 1
    %517 = vsyncpa %s516, 1
    %518 = vsyncpa [#allocation5], 1

</llo_original>
